<compile_context>
chip_gen: v7x
topology: tpu7x:2x2x1
jax: 0.10.0
libtpu: 0.0.40
codegen_flags: <defaults>
</compile_context>

<pallas_src>
import functools

import jax
import jax.numpy as jnp
from jax.experimental import pallas as pl
from jax.experimental.pallas import tpu as pltpu


_LANE_CAP = 8192                  # widest 2-D view row: 32 KiB of f32 lanes
_TARGET_BLOCK_BYTES = 2 * 2**20   # ~2 MiB blocks: ~85% of HBM roofline


# ---------------------------------------------------------------------------
# Planning helpers
# ---------------------------------------------------------------------------

def _device_plan():
    """Per-generation VMEM budget / fast-path threshold / megacore split."""
    kind = ""
    try:
        kind = jax.devices()[0].device_kind.lower()
    except Exception:
        pass
    if "v7" in kind:
        # 64 MiB physical VMEM, 2 TensorCores per chip.
        return {"vmem_limit": 48 * 2**20, "fast_cap": 12 * 2**20, "split": True}
    if "v5" in kind or "v6" in kind:
        # 128 MiB physical VMEM, 1 TensorCore per chip.
        return {"vmem_limit": 96 * 2**20, "fast_cap": 24 * 2**20, "split": False}
    # Unknown generation: stay inside the default 32 MiB scoped-VMEM budget.
    return {"vmem_limit": 32 * 2**20, "fast_cap": 8 * 2**20, "split": False}


def _row_cap(lane, block_bytes):
    """Rows per block so one (rows, lane) f32 block is ~block_bytes."""
    return max(8, (block_bytes // (lane * 4)) // 8 * 8)


def _pick_tile(extent, align, cap):
    """Largest `align`-multiple <= cap dividing `extent` (full extent if it
    already fits under cap).  Returns None instead of silently falling back to
    an oversized full-extent block (perf-review robustness guard)."""
    if extent <= cap:
        return extent
    t = (cap // align) * align
    while t >= align:
        if extent % t == 0:
            return t
        t -= align
    return None


def _layout_and_tiles(x_flat, lane_cap, block_bytes):
    """Lane-dense 2-D view (R, L) of the flat array plus a row tile `br`.

    Prefers the widest L (multiple of 128, <= lane_cap) that divides the
    element count with R >= 8; blocks are (br, L) full-row slabs so every DMA
    is one contiguous burst.  If nothing factors cleanly, pads with x_flat[0]
    (neutral for min/max) to a divisible shape.  Returns (x2d, orig_size, br).
    """
    total = x_flat.shape[0]
    lane = min(total // 8, lane_cap) // 128 * 128
    while lane >= 128:
        if total % lane == 0:
            br = _pick_tile(total // lane, 8, _row_cap(lane, block_bytes))
            if br is not None:
                return x_flat.reshape(total // lane, lane), total, br
        lane -= 128
    # No friendly factorization: pad (value-neutral for min/max) and reshape.
    lane = 1024 if total >= 1024 else 128
    rows = -(-total // lane)
    rcap = _row_cap(lane, block_bytes)
    if rows > rcap:
        rows = -(-rows // 8) * 8          # guarantee a multiple-of-8 row tile
    fill = jnp.full((rows * lane - total,), x_flat[0], dtype=x_flat.dtype)
    x2d = jnp.concatenate([x_flat, fill]).reshape(rows, lane)
    return x2d, total, _pick_tile(rows, 8, rcap)


def _input_spec(block_shape, index_map, buffers=None):
    """BlockSpec with deeper multi-buffering when this JAX supports it."""
    if buffers is not None and buffers != 2:
        try:
            return pl.BlockSpec(block_shape, index_map,
                                pipeline_mode=pl.Buffered(buffers))
        except Exception:
            pass
    return pl.BlockSpec(block_shape, index_map)


# ---------------------------------------------------------------------------
# Fast path: whole array VMEM-resident, one grid step, 2x HBM bytes.
# ---------------------------------------------------------------------------

def _resident_kernel(x_ref, y_ref):
    x = x_ref[...]
    mn = jnp.min(x)
    mx = jnp.max(x)
    diff = mx - mn
    inv = 1.0 / diff                  # scalar divide, hoisted off the VPU path
    # x4 = (x - mn) * inv;  x5 = x4 * diff + mn;  y = x + x5
    y_ref[...] = x + (x - mn) * inv * diff + mn


def _fast_single_pass(x2d, vmem_limit):
    R, L = x2d.shape
    nbytes = x2d.size * x2d.dtype.itemsize
    return pl.pallas_call(
        _resident_kernel,
        out_shape=jax.ShapeDtypeStruct((R, L), jnp.float32),
        grid_spec=pltpu.PrefetchScalarGridSpec(
            num_scalar_prefetch=0,
            grid=(1,),
            in_specs=[pl.BlockSpec((R, L), lambda i: (0, 0))],
            out_specs=pl.BlockSpec((R, L), lambda i: (0, 0)),
        ),
        compiler_params=pltpu.CompilerParams(
            dimension_semantics=("arbitrary",),
            vmem_limit_bytes=vmem_limit,
        ),
        cost_estimate=pl.CostEstimate(flops=7 * x2d.size, transcendentals=0,
                                      bytes_accessed=2 * nbytes),
    )(x2d)


# ---------------------------------------------------------------------------
# Fused streaming path: (phase, row_tile) grid, single launch, 3x HBM bytes.
# ---------------------------------------------------------------------------

def _fused_two_phase_kernel(x_ref, y_ref, mn_ref, mx_ref):
    phase = pl.program_id(0)
    i = pl.program_id(1)

    @pl.when((phase == 0) & (i == 0))
    def _init():
        mn_ref[...] = jnp.full_like(mn_ref, jnp.inf)
        mx_ref[...] = jnp.full_like(mx_ref, -jnp.inf)

    @pl.when(phase == 0)
    def _reduce():
        # Lane-shaped (1, L) running min/max: VPU mins + one sublane reduce per
        # slab; no per-tile SMEM scalar read-modify-write chain.
        v = x_ref[...]
        mn_ref[...] = jnp.minimum(mn_ref[...], jnp.min(v, axis=0, keepdims=True))
        mx_ref[...] = jnp.maximum(mx_ref[...], jnp.max(v, axis=0, keepdims=True))

    @pl.when(phase == 1)
    def _renorm_add():
        mn = jnp.min(mn_ref[...])     # cheap cross-lane collapse, hidden by DMA
        mx = jnp.max(mx_ref[...])
        diff = mx - mn
        inv = 1.0 / diff
        x = x_ref[...]
        y_ref[...] = x + (x - mn) * inv * diff + mn


def _fused_two_phase(x2d, br, vmem_limit):
    R, L = x2d.shape
    nbytes = x2d.size * x2d.dtype.itemsize
    return pl.pallas_call(
        _fused_two_phase_kernel,
        out_shape=jax.ShapeDtypeStruct((R, L), jnp.float32),
        grid_spec=pltpu.PrefetchScalarGridSpec(
            num_scalar_prefetch=0,
            grid=(2, R // br),
            in_specs=[_input_spec((br, L), lambda p, i: (i, 0), buffers=3)],
            # p == 0 -> output block pinned at (0, 0): nothing is written in
            #           phase 0 and the block index never changes, so nothing
            #           stale is flushed.
            # p == 1 -> output block follows i: each block written exactly once.
            out_specs=pl.BlockSpec((br, L), lambda p, i: (p * i, 0)),
            scratch_shapes=[pltpu.VMEM((1, L), jnp.float32),    # running min
                            pltpu.VMEM((1, L), jnp.float32)],   # running max
        ),
        compiler_params=pltpu.CompilerParams(
            # Phase 1 consumes the complete phase-0 reduction held in per-core
            # scratch, so this grid cannot be sharded across TensorCores.
            dimension_semantics=("arbitrary", "arbitrary"),
            vmem_limit_bytes=vmem_limit,
        ),
        cost_estimate=pl.CostEstimate(flops=7 * x2d.size, transcendentals=0,
                                      bytes_accessed=3 * nbytes),
    )(x2d)


# ---------------------------------------------------------------------------
# Split streaming path (multi-TensorCore chips, e.g. v7x): two fully
# "parallel" pallas_calls so both TCs stream HBM.
# ---------------------------------------------------------------------------

def _partial_minmax_kernel(x_ref, pmin_ref, pmax_ref):
    v = x_ref[...]
    # One scalar per row slab, broadcast across a single 128-lane vector so the
    # partial store is a clean full-lane write (negligible HBM footprint).
    pmin_ref[...] = jnp.full(pmin_ref.shape, jnp.min(v), jnp.float32)
    pmax_ref[...] = jnp.full(pmax_ref.shape, jnp.max(v), jnp.float32)


def _apply_renorm_add_kernel(stats_ref, x_ref, y_ref):
    mn = stats_ref[0]
    mx = stats_ref[1]
    diff = mx - mn
    inv = 1.0 / diff
    x = x_ref[...]
    y_ref[...] = x + (x - mn) * inv * diff + mn


def _split_two_calls(x2d, br, vmem_limit):
    R, L = x2d.shape
    gi = R // br
    nbytes = x2d.size * x2d.dtype.itemsize

    pmin, pmax = pl.pallas_call(
        _partial_minmax_kernel,
        out_shape=(jax.ShapeDtypeStruct((gi, 1, 128), jnp.float32),
                   jax.ShapeDtypeStruct((gi, 1, 128), jnp.float32)),
        grid_spec=pltpu.PrefetchScalarGridSpec(
            num_scalar_prefetch=0,
            grid=(gi,),
            in_specs=[_input_spec((br, L), lambda i: (i, 0), buffers=3)],
            out_specs=(pl.BlockSpec((1, 1, 128), lambda i: (i, 0, 0)),
                       pl.BlockSpec((1, 1, 128), lambda i: (i, 0, 0))),
        ),
        compiler_params=pltpu.CompilerParams(
            dimension_semantics=("parallel",),
            vmem_limit_bytes=vmem_limit,
        ),
        cost_estimate=pl.CostEstimate(flops=2 * x2d.size, transcendentals=0,
                                      bytes_accessed=nbytes),
    )(x2d)

    # Tiny final reduction (gi * 128 elements) in plain XLA.
    stats = jnp.stack([jnp.min(pmin), jnp.max(pmax)])      # (2,) f32 -> SMEM

    return pl.pallas_call(
        _apply_renorm_add_kernel,
        out_shape=jax.ShapeDtypeStruct((R, L), jnp.float32),
        grid_spec=pltpu.PrefetchScalarGridSpec(
            num_scalar_prefetch=0,
            grid=(gi,),
            in_specs=[pl.BlockSpec(memory_space=pltpu.MemorySpace.SMEM),
                      _input_spec((br, L), lambda i: (i, 0), buffers=3)],
            out_specs=pl.BlockSpec((br, L), lambda i: (i, 0)),
        ),
        compiler_params=pltpu.CompilerParams(
            dimension_semantics=("parallel",),
            vmem_limit_bytes=vmem_limit,
        ),
        cost_estimate=pl.CostEstimate(flops=5 * x2d.size, transcendentals=0,
                                      bytes_accessed=2 * nbytes),
    )(stats, x2d)


# ---------------------------------------------------------------------------
# Dispatcher + AGCnet forward
# ---------------------------------------------------------------------------

def fused_minmax_renorm_add(x_flat, *, mode=None, lane_cap=_LANE_CAP,
                            block_bytes=_TARGET_BLOCK_BYTES):
    """y = x + ((x - min(x)) / (max(x) - min(x)) * (max(x) - min(x)) + min(x)).

    x_flat: 1-D array.  mode: None (auto), "fast", "fused" or "split"
    (explicit modes are used by tests / benchmarks).  Returns a 1-D array of
    the same length as x_flat.
    """
    x_flat = x_flat.astype(jnp.float32)
    plan = _device_plan()
    x2d, orig, br = _layout_and_tiles(x_flat, lane_cap, block_bytes)

    if mode is None:
        if x2d.size * x2d.dtype.itemsize <= plan["fast_cap"]:
            mode = "fast"          # whole array VMEM-resident: 2x HBM bytes
        elif plan["split"]:
            mode = "split"         # v7x: both TensorCores stream HBM
        else:
            mode = "fused"         # single launch, 3x HBM bytes

    if mode == "fast":
        y2d = _fast_single_pass(x2d, plan["vmem_limit"])
    elif mode == "split":
        y2d = _split_two_calls(x2d, br, plan["vmem_limit"])
    else:
        y2d = _fused_two_phase(x2d, br, plan["vmem_limit"])

    return y2d.reshape(-1)[:orig]


@jax.jit
def agcnet_forward(x, w1, w2):
    """x: (N, C, H, W).  w1: (C, C, 3, 3), w2: (C, C, 1, 1) conv weights.

    Returns y = x + x5 exactly as the PyTorch reference.  The reference's
    conv / skimage-exposure branch (x0, x1, g11..g22, x44) never influences
    the returned value, so it is not lowered (w1, w2 are unused).
    """
    # TODO(synk): the reference's skimage.exposure adjust_log/adjust_gamma
    # branch is dead code w.r.t. the returned y and is intentionally not lowered.
    del w1, w2
    x = x.astype(jnp.float32)
    y_flat = fused_minmax_renorm_add(x.reshape(-1))
    return y_flat.reshape(x.shape)


# ---------------------------------------------------------------------------
# Main
# ---------------------------------------------------------------------------

if __name__ == "__main__":
    key = jax.random.PRNGKey(0)
    k_x, k_w1, k_w2, k_big = jax.random.split(key, 4)

    def reference(v):
        mn = jnp.min(v)
        mx = jnp.max(v)
        x4 = (v - mn) / (mx - mn)
        return v + (x4 * (mx - mn) + mn)

    # Primary: module-shaped input (N, C, H, W) = (2, 4, 16, 16) -> fast path.
    N, C, H, W = 2, 4, 16, 16
    x = jax.random.normal(k_x, (N, C, H, W), dtype=jnp.float32)
    w1 = 0.1 * jax.random.normal(k_w1, (C, C, 3, 3), dtype=jnp.float32)
    w2 = 0.1 * jax.random.normal(k_w2, (C, C, 1, 1), dtype=jnp.float32)

    y = jax.block_until_ready(agcnet_forward(x, w1, w2))
    assert y.shape == x.shape
    assert jnp.allclose(y, reference(x), atol=1e-4, rtol=1e-4), "fast path mismatch"

    # Secondary: exercise the streaming (fused) and multi-core (split) paths on
    # a larger flat input with small forced tiles so the multi-tile grids are
    # covered on any TPU generation.
    big = jax.random.normal(k_big, (64 * 1024,), dtype=jnp.float32)
    ref_big = reference(big)
    for m in ("fused", "split"):
        run = jax.jit(functools.partial(fused_minmax_renorm_add, mode=m,
                                        lane_cap=512, block_bytes=32 * 1024))
        got = jax.block_until_ready(run(big))
        assert jnp.allclose(got, ref_big, atol=1e-4, rtol=1e-4), f"{m} path mismatch"

    print("KERNEL_OK")
</pallas_src>

<mosaic_0001>
module attributes {stable_mosaic.version = 11 : i64} {
  func.func @_resident_kernel(%arg0: i32, %arg1: memref<8x256xf32, #tpu.memory_space<vmem>>, %arg2: memref<8x256xf32, #tpu.memory_space<vmem>>) attributes {dimension_semantics = [#tpu.dimension_semantics<arbitrary>], iteration_bounds = array<i64: 1>, scalar_prefetch = 0 : i64, scratch_operands = 0 : i64, tpu.core_type = #tpu.core_type<tc>, window_params = [{pipeline_mode = #tpu.pipeline_mode<synchronous>, transform_indices = @transform_0, window_bounds = array<i64: 8, 256>}, {pipeline_mode = #tpu.pipeline_mode<synchronous>, transform_indices = @transform_1, window_bounds = array<i64: 8, 256>}]} {
    %c0 = arith.constant 0 : index
    %c0_0 = arith.constant 0 : index
    %0 = vector.load %arg1[%c0, %c0_0] : memref<8x256xf32, #tpu.memory_space<vmem>>, vector<8x256xf32>
    %1 = vector.shape_cast %0 : vector<8x256xf32> to vector<1x8x256xf32>
    %cst = arith.constant dense<0x7F800000> : vector<1xf32>
    %2 = vector.multi_reduction <minimumf>, %1, %cst [1, 2] : vector<1x8x256xf32> to vector<1xf32>
    %3 = vector.shape_cast %2 : vector<1xf32> to vector<1x1x1xf32>
    %4 = vector.extract %3[0, 0, 0] : f32 from vector<1x1x1xf32>
    %5 = vector.shape_cast %0 : vector<8x256xf32> to vector<1x8x256xf32>
    %cst_1 = arith.constant dense<0xFF800000> : vector<1xf32>
    %6 = vector.multi_reduction <maximumf>, %5, %cst_1 [1, 2] : vector<1x8x256xf32> to vector<1xf32>
    %7 = vector.shape_cast %6 : vector<1xf32> to vector<1x1x1xf32>
    %8 = vector.extract %7[0, 0, 0] : f32 from vector<1x1x1xf32>
    %9 = arith.subf %8, %4 : f32
    %cst_2 = arith.constant 1.000000e+00 : f32
    %10 = arith.divf %cst_2, %9 : f32
    %11 = vector.broadcast %4 : f32 to vector<8x256xf32>
    %12 = arith.subf %0, %11 : vector<8x256xf32>
    %13 = vector.broadcast %10 : f32 to vector<8x256xf32>
    %14 = arith.mulf %12, %13 : vector<8x256xf32>
    %15 = vector.broadcast %9 : f32 to vector<8x256xf32>
    %16 = arith.mulf %14, %15 : vector<8x256xf32>
    %17 = arith.addf %0, %16 : vector<8x256xf32>
    %18 = vector.broadcast %4 : f32 to vector<8x256xf32>
    %19 = arith.addf %17, %18 : vector<8x256xf32>
    %c0_3 = arith.constant 0 : index
    %c0_4 = arith.constant 0 : index
    %20 = vector.load %arg2[%c0_3, %c0_4] : memref<8x256xf32, #tpu.memory_space<vmem>>, vector<8x256xf32>
    tpu.vector_store %arg2[%c0_3, %c0_4], %19 {strides = array<i32>} : memref<8x256xf32, #tpu.memory_space<vmem>>, vector<8x256xf32>,
    return
  }
  func.func @transform_0(%arg0: i32) -> (i32, i32) {
    %c0_i32 = arith.constant 0 : i32
    %c0_i32_0 = arith.constant 0 : i32
    %c0_i32_1 = arith.constant 0 : i32
    return %c0_i32, %c0_i32_0 : i32, i32
  }
  func.func @transform_1(%arg0: i32) -> (i32, i32) {
    %c0_i32 = arith.constant 0 : i32
    %c0_i32_0 = arith.constant 0 : i32
    %c0_i32_1 = arith.constant 0 : i32
    return %c0_i32, %c0_i32_0 : i32, i32
  }
}

</mosaic_0001>

<llo_original>
// kernel: agcnet_forward.1
$region0: #{agcnet_forward.1}
  #allocation0 [shape = 'u32[]', space=smem, size = 0x4, offset = 0x4, fixed_abs, tag = 'smem constant byte address 0x4 - core index']
  #allocation1 [shape = 'u32[144,128]{1,0:T(1,128)}', space=vmem, size = 0x12000, scoped, tag = 'internal scratch']
  %s0 = inlined_call_operand.vmem [shape: f32[8,256], index: 0, kind: input, shape index: {}]
  %s1 = inlined_call_operand.vmem [shape: f32[8,256], index: 1, kind: output, shape index: {}]
  %s2 = sld [smem:[#allocation0]]
  $region14: #{agcnet_forward.1} parent=0
    _
  %s4 = ssub.s32 1, %s2
  %s5 = scalar_select 0, %s4, %s2
  // Predicated region
  $region2: #{agcnet_forward.1} parent=0 // pred_check
    _
  $region3: #{agcnet_forward.1} parent=0 // pred_check_branch
    %7 = sbr.rel (0) target = $region5
  $region4: #{agcnet_forward.1} parent=0 // pred_region
    _
  $region5: #{agcnet_forward.1} parent=0 // pred_fallthru
    _
  %v8 = vld [vmem:[%s0] sm:$0xff]
  %v9 = vld [vmem:[%s0 + $0x8] sm:$0xff]
  %v10 = vmin.f32 %v8, %v9
  %11 = vmin.xlane.f32.xlu0 %v10
  %v12 = vpop.xlane.xlu0 %11
  %v13 = vrot.slane %v12, 4
  %v14 = vmin.f32 %v12, %v13
  %v15 = vrot.slane %v14, 2
  %v16 = vmin.f32 %v14, %v15
  %v17 = vrot.slane %v16, 1
  %v18 = vmin.f32 %v16, %v17
  %s19 = vtos %v18
  %v20 = vmax.f32 %v8, %v9
  %21 = vmax.xlane.f32.xlu0 %v20
  %v22 = vpop.xlane.xlu0 %21
  %v23 = vrot.slane %v22, 4
  %v24 = vmax.f32 %v22, %v23
  %v25 = vrot.slane %v24, 2
  %v26 = vmax.f32 %v24, %v25
  %v27 = vrot.slane %v26, 1
  %v28 = vmax.f32 %v26, %v27
  %s29 = vtos %v28
  %s30 = ssub.f32 %s29, %s19
  %v31 = vstv %s30
  %v32 = vrcp.pop %v31
  %s33 = vtos %v32
  %v34 = vstv %s19
  %v35 = vsub.f32 %v8, %v34
  %v36 = vsub.f32 %v9, %v34
  %v37 = vstv %s33
  %v38 = vmul.f32 %v35, %v37
  %v39 = vmul.f32 %v36, %v37
  %v40 = vstv %s30
  %v41 = vmul.f32 %v38, %v40
  %v42 = vmul.f32 %v39, %v40
  %v43 = vadd.f32 %v8, %v41
  %v44 = vadd.f32 %v9, %v42
  %v45 = vadd.f32 %v43, %v34
  %v46 = vadd.f32 %v44, %v34
  %47 = vst [vmem:[%s1] sm:$0xff] %v45
  %48 = vst [vmem:[%s1 + $0x8] sm:$0xff] %v46
  // Predicated region
  $region6: #{agcnet_forward.1} parent=0 // pred_check
    _
  $region7: #{agcnet_forward.1} parent=0 // pred_check_branch
    %50 = sbr.rel (0) target = $region9
  $region8: #{agcnet_forward.1} parent=0 // pred_region
    _
  $region9: #{agcnet_forward.1} parent=0 // pred_fallthru
    _
  // Predicated region
  $region10: #{agcnet_forward.1} parent=0 // pred_check
    _
  $region11: #{agcnet_forward.1} parent=0 // pred_check_branch
    %52 = sbr.rel (0) target = $region13
  $region12: #{agcnet_forward.1} parent=0 // pred_region
    _
  $region13: #{agcnet_forward.1} parent=0 // pred_fallthru
    _

</llo_original>
